<compile_context>
chip_gen: v5e
topology: v5e:2x2
jax: 0.10.0
libtpu: 0.0.40
codegen_flags: <defaults>
</compile_context>

<pallas_src>
import functools

import jax
import jax.numpy as jnp
from jax import lax
from jax.experimental import pallas as pl
from jax.experimental.pallas import tpu as pltpu
import numpy as np


def _bottleneck_kernel(x_ref, mask_ref, w1_ref, b1_ref, w2_ref, b2_ref,
                       w3_ref, b3_ref, o_ref, *, W, HW, batch_block,
                       matmul_dtype):
    """Fused 1x1 -> 3x3 -> 1x1 conv (+ folded BN) + ReLU + identity residual.

    Activations are laid out (channels, H*W): pixels on the 128-wide lane
    axis, channels on sublanes.
    """
    md = matmul_dtype
    w1 = w1_ref[...]                     # (Cpad, Cin)    BN1 scale folded in
    w2 = w2_ref[...]                     # (Cpad, 9*Cpad) BN2 scale folded in
    w3 = w3_ref[...]                     # (Cout, Cpad)   BN3 scale folded in
    b1 = b1_ref[...]                     # (Cpad, 1) f32
    b2 = b2_ref[...]                     # (Cpad, 1) f32
    b3 = b3_ref[...]                     # (Cout, 1) f32
    mask = mask_ref[...]                 # (9, HW) f32: 1 where shifted pixel in-image

    for b in range(batch_block):         # static unroll over images in this block
        x = x_ref[b]                     # (Cin, HW)
        xf = x.astype(jnp.float32)

        # ---- conv_in: 1x1 conv (per-pixel matmul) + folded BN + ReLU ----
        h1 = jnp.dot(w1, x.astype(md), preferred_element_type=jnp.float32)
        h1 = jnp.maximum(h1 + b1, 0.0)                        # (Cpad, HW) f32

        # ---- conv_mid: 3x3, stride 1, pad 1 ----
        # 9 lane-rolled taps (XLU) stacked on sublanes (im2col), one matmul.
        pieces = []
        t = 0
        for oy in (-1, 0, 1):
            for ox in (-1, 0, 1):
                shift = (-(oy * W + ox)) % HW
                tap = h1 if shift == 0 else pltpu.roll(h1, shift, axis=1)
                if oy != 0 or ox != 0:
                    tap = tap * mask[t:t + 1, :]              # zero wrapped pixels
                pieces.append(tap)
                t += 1
        stacked = jnp.concatenate(pieces, axis=0)             # (9*Cpad, HW)
        h2 = jnp.dot(w2, stacked.astype(md), preferred_element_type=jnp.float32)
        h2 = jnp.maximum(h2 + b2, 0.0)                        # (Cpad, HW) f32

        # ---- conv_out: 1x1 conv + folded BN (no ReLU) ----
        h3 = jnp.dot(w3, h2.astype(md), preferred_element_type=jnp.float32)

        # ---- identity shortcut + merge ReLU ----
        o_ref[b] = jnp.maximum(h3 + b3 + xf, 0.0).astype(o_ref.dtype)


def _build_tap_mask(H, W):
    """(9, H*W) f32 mask: 1 where the (oy,ox)-shifted pixel is inside the image."""
    p = np.arange(H * W)
    y, x = p // W, p % W
    rows = []
    for oy in (-1, 0, 1):
        for ox in (-1, 0, 1):
            valid = ((y + oy >= 0) & (y + oy < H) &
                     (x + ox >= 0) & (x + ox < W)).astype(np.float32)
            rows.append(valid)
    return jnp.asarray(np.stack(rows, axis=0))


def bottleneck_forward(x_nchw, kernel_params, *, batch_block=1,
                       matmul_dtype=jnp.float32):
    """NCHW in / NCHW out.  Only free reshapes at the boundary (no transposes)."""
    w1, b1, w2, b2, w3, b3 = kernel_params
    N, Cin, H, W = x_nchw.shape
    HW = H * W
    Cout = w3.shape[0]
    if N % batch_block:
        raise ValueError("batch must be divisible by batch_block")

    x = x_nchw.reshape(N, Cin, HW)            # contiguous reshape: free
    mask = _build_tap_mask(H, W)

    kernel = functools.partial(_bottleneck_kernel, W=W, HW=HW,
                               batch_block=batch_block,
                               matmul_dtype=matmul_dtype)

    def const_spec(a):
        # full-array block, constant index -> DMA'd once, kept resident
        return pl.BlockSpec(a.shape, lambda n, _nd=a.ndim: (0,) * _nd)

    out = pl.pallas_call(
        kernel,
        out_shape=jax.ShapeDtypeStruct((N, Cout, HW), x.dtype),
        grid_spec=pltpu.PrefetchScalarGridSpec(
            num_scalar_prefetch=0,
            grid=(N // batch_block,),
            in_specs=[
                pl.BlockSpec((batch_block, Cin, HW), lambda n: (n, 0, 0)),
                const_spec(mask),
                const_spec(w1), const_spec(b1),
                const_spec(w2), const_spec(b2),
                const_spec(w3), const_spec(b3),
            ],
            out_specs=pl.BlockSpec((batch_block, Cout, HW),
                                   lambda n: (n, 0, 0)),
        ),
        compiler_params=pltpu.CompilerParams(
            dimension_semantics=("parallel",)),   # megacore over batch blocks
    )(x, mask, w1, b1, w2, b2, w3, b3)
    return out.reshape(N, Cout, H, W)             # free reshape back to NCHW


def init_params(key, mid_channels, *, dtype=jnp.float32):
    """PyTorch-layout parameters mirroring the module's __init__ shapes."""
    Cmid = mid_channels
    Cin = Cout = 4 * mid_channels
    ks = jax.random.split(key, 6)

    def kaiming(k, shape):  # OIHW conv weight, kaiming_normal_ (fan_in, gain sqrt(2))
        fan_in = shape[1] * shape[2] * shape[3]
        return jax.random.normal(k, shape, dtype) * (2.0 / fan_in) ** 0.5

    wc1 = kaiming(ks[0], (Cmid, Cin, 1, 1))
    wc2 = kaiming(ks[1], (Cmid, Cmid, 3, 3))
    wc3 = kaiming(ks[2], (Cout, Cmid, 1, 1))

    def bn_params(k, c):
        # Non-trivial eval-mode stats to exercise the BN affine path.
        k1, k2, k3, k4 = jax.random.split(k, 4)
        gamma = 1.0 + 0.1 * jax.random.normal(k1, (c,), dtype)
        beta = 0.1 * jax.random.normal(k2, (c,), dtype)
        mean = 0.1 * jax.random.normal(k3, (c,), dtype)
        var = jax.random.uniform(k4, (c,), dtype, 0.5, 1.5)
        return gamma, beta, mean, var

    bn1, bn2, bn3 = bn_params(ks[3], Cmid), bn_params(ks[4], Cmid), bn_params(ks[5], Cout)
    return (wc1, bn1), (wc2, bn2), (wc3, bn3)


def pack_kernel_params(torch_params, *, eps=1e-5, matmul_dtype=jnp.float32):
    """PyTorch OIHW weights + BN stats -> kernel layout.

    BN(eval) scale is folded into the conv weights (row scale); only the bias
    remains as a per-channel add.  Cmid is zero-padded to a multiple of 8.
    """
    (wc1, bn1), (wc2, bn2), (wc3, bn3) = torch_params
    Cmid, Cin = wc1.shape[0], wc1.shape[1]
    Cout = wc3.shape[0]
    Cpad = -(-Cmid // 8) * 8          # sublane-align the bottleneck width

    def bn_fold(bn):
        gamma, beta, mean, var = bn
        scale = gamma / jnp.sqrt(var + eps)
        bias = beta - mean * scale
        return scale, bias

    s1, bias1 = bn_fold(bn1)
    s2, bias2 = bn_fold(bn2)
    s3, bias3 = bn_fold(bn3)

    w1 = jnp.zeros((Cpad, Cin), jnp.float32).at[:Cmid].set(
        wc1[:, :, 0, 0] * s1[:, None])
    b1 = jnp.zeros((Cpad, 1), jnp.float32).at[:Cmid, 0].set(bias1)

    # 3x3 weights flattened to (Cpad, 9*Cpad); tap order (ky, kx) row-major,
    # matching the kernel's (oy, ox) loop and the tap mask.
    w2 = jnp.zeros((Cpad, 9 * Cpad), jnp.float32)
    for ky in range(3):
        for kx in range(3):
            t = ky * 3 + kx
            w2 = w2.at[:Cmid, t * Cpad:t * Cpad + Cmid].set(
                wc2[:, :, ky, kx] * s2[:, None])
    b2 = jnp.zeros((Cpad, 1), jnp.float32).at[:Cmid, 0].set(bias2)

    w3 = jnp.zeros((Cout, Cpad), jnp.float32).at[:, :Cmid].set(
        wc3[:, :, 0, 0] * s3[:, None])
    b3 = bias3.reshape(Cout, 1).astype(jnp.float32)

    md = matmul_dtype
    return (w1.astype(md), b1, w2.astype(md), b2, w3.astype(md), b3)


def reference_forward(x_nchw, torch_params, eps=1e-5):
    """Pure-JAX reference replicating the PyTorch forward (eval-mode BN)."""
    (wc1, bn1), (wc2, bn2), (wc3, bn3) = torch_params

    def conv(x, w, pad):
        return lax.conv_general_dilated(
            x, w, window_strides=(1, 1), padding=[(pad, pad), (pad, pad)],
            dimension_numbers=("NCHW", "OIHW", "NCHW"))

    def bn(x, p):
        gamma, beta, mean, var = p
        scale = (gamma / jnp.sqrt(var + eps)).reshape(1, -1, 1, 1)
        return (x - mean.reshape(1, -1, 1, 1)) * scale + beta.reshape(1, -1, 1, 1)

    h = jax.nn.relu(bn(conv(x_nchw, wc1, 0), bn1))
    h = jax.nn.relu(bn(conv(h, wc2, 1), bn2))
    h = bn(conv(h, wc3, 0), bn3)
    return jax.nn.relu(h + x_nchw)            # identity shortcut


if __name__ == "__main__":
    mid_channels = 4
    in_channels = mid_channels * 4            # = out_channels = 16
    N, H, W = 2, 16, 16

    key = jax.random.PRNGKey(0)
    kx, kp = jax.random.split(key)
    x = jax.random.normal(kx, (N, in_channels, H, W), jnp.float32)  # NCHW

    torch_params = init_params(kp, mid_channels)
    kernel_params = pack_kernel_params(torch_params)

    out = jax.block_until_ready(bottleneck_forward(x, kernel_params, batch_block=1))
    ref = jax.block_until_ready(reference_forward(x, torch_params))

    np.testing.assert_allclose(np.asarray(out), np.asarray(ref), rtol=1e-4, atol=1e-4)
    assert out.shape == (N, in_channels, H, W)
    print("KERNEL_OK")
</pallas_src>

<mosaic_0001>
module attributes {stable_mosaic.version = 11 : i64} {
  func.func @_bottleneck_kernel(%arg0: i32, %arg1: memref<1x16x256xf32, #tpu.memory_space<vmem>>, %arg2: memref<9x256xf32, #tpu.memory_space<vmem>>, %arg3: memref<8x16xf32, #tpu.memory_space<vmem>>, %arg4: memref<8x1xf32, #tpu.memory_space<vmem>>, %arg5: memref<8x72xf32, #tpu.memory_space<vmem>>, %arg6: memref<8x1xf32, #tpu.memory_space<vmem>>, %arg7: memref<16x8xf32, #tpu.memory_space<vmem>>, %arg8: memref<16x1xf32, #tpu.memory_space<vmem>>, %arg9: memref<1x16x256xf32, #tpu.memory_space<vmem>>) attributes {dimension_semantics = [#tpu.dimension_semantics<parallel>], iteration_bounds = array<i64: 2>, scalar_prefetch = 0 : i64, scratch_operands = 0 : i64, tpu.core_type = #tpu.core_type<tc>, window_params = [{transform_indices = @transform_0, window_bounds = array<i64: 1, 16, 256>}, {pipeline_mode = #tpu.pipeline_mode<synchronous>, transform_indices = @transform_1, window_bounds = array<i64: 9, 256>}, {pipeline_mode = #tpu.pipeline_mode<synchronous>, transform_indices = @transform_2, window_bounds = array<i64: 8, 16>}, {pipeline_mode = #tpu.pipeline_mode<synchronous>, transform_indices = @transform_3, window_bounds = array<i64: 8, 1>}, {pipeline_mode = #tpu.pipeline_mode<synchronous>, transform_indices = @transform_4, window_bounds = array<i64: 8, 72>}, {pipeline_mode = #tpu.pipeline_mode<synchronous>, transform_indices = @transform_5, window_bounds = array<i64: 8, 1>}, {pipeline_mode = #tpu.pipeline_mode<synchronous>, transform_indices = @transform_6, window_bounds = array<i64: 16, 8>}, {pipeline_mode = #tpu.pipeline_mode<synchronous>, transform_indices = @transform_7, window_bounds = array<i64: 16, 1>}, {transform_indices = @transform_8, window_bounds = array<i64: 1, 16, 256>}]} {
    %c0 = arith.constant 0 : index
    %c0_0 = arith.constant 0 : index
    %0 = vector.load %arg3[%c0, %c0_0] : memref<8x16xf32, #tpu.memory_space<vmem>>, vector<8x16xf32>
    %c0_1 = arith.constant 0 : index
    %c0_2 = arith.constant 0 : index
    %1 = vector.load %arg5[%c0_1, %c0_2] : memref<8x72xf32, #tpu.memory_space<vmem>>, vector<8x72xf32>
    %c0_3 = arith.constant 0 : index
    %c0_4 = arith.constant 0 : index
    %2 = vector.load %arg7[%c0_3, %c0_4] : memref<16x8xf32, #tpu.memory_space<vmem>>, vector<16x8xf32>
    %c0_5 = arith.constant 0 : index
    %c0_6 = arith.constant 0 : index
    %3 = vector.load %arg4[%c0_5, %c0_6] : memref<8x1xf32, #tpu.memory_space<vmem>>, vector<8x1xf32>
    %c0_7 = arith.constant 0 : index
    %c0_8 = arith.constant 0 : index
    %4 = vector.load %arg6[%c0_7, %c0_8] : memref<8x1xf32, #tpu.memory_space<vmem>>, vector<8x1xf32>
    %c0_9 = arith.constant 0 : index
    %c0_10 = arith.constant 0 : index
    %5 = vector.load %arg8[%c0_9, %c0_10] : memref<16x1xf32, #tpu.memory_space<vmem>>, vector<16x1xf32>
    %c0_11 = arith.constant 0 : index
    %c0_12 = arith.constant 0 : index
    %6 = vector.load %arg2[%c0_11, %c0_12] : memref<9x256xf32, #tpu.memory_space<vmem>>, vector<9x256xf32>
    %c0_13 = arith.constant 0 : index
    %c0_14 = arith.constant 0 : index
    %c0_15 = arith.constant 0 : index
    %7 = vector.load %arg1[%c0_13, %c0_14, %c0_15] : memref<1x16x256xf32, #tpu.memory_space<vmem>>, vector<1x16x256xf32>
    %8 = vector.shape_cast %7 : vector<1x16x256xf32> to vector<16x256xf32>
    %cst = arith.constant dense<0.000000e+00> : vector<8x256xf32>
    %9 = tpu.matmul %0, %8, %cst {dimension_numbers = #tpu.dot_dimension_numbers<[1], [0], [0], [1], [0, 0, 1, 1], [], []>} : vector<8x16xf32>, vector<16x256xf32>, vector<8x256xf32> -> vector<8x256xf32>
    %10 = vector.broadcast %3 : vector<8x1xf32> to vector<8x256xf32>
    %11 = arith.addf %9, %10 : vector<8x256xf32>
    %cst_16 = arith.constant 0.000000e+00 : f32
    %12 = vector.broadcast %cst_16 : f32 to vector<8x256xf32>
    %13 = arith.maximumf %11, %12 : vector<8x256xf32>
    %c17_i32 = arith.constant 17 : i32
    %14 = tpu.dynamic_rotate %13 by %c17_i32 dim 1 : vector<8x256xf32>, i32 -> vector<8x256xf32>
    %15 = vector.extract_strided_slice %6 {offsets = [0, 0], sizes = [1, 256], strides = [1, 1]} : vector<9x256xf32> to vector<1x256xf32>
    %16 = vector.broadcast %15 : vector<1x256xf32> to vector<8x256xf32>
    %17 = arith.mulf %14, %16 : vector<8x256xf32>
    %c16_i32 = arith.constant 16 : i32
    %18 = tpu.dynamic_rotate %13 by %c16_i32 dim 1 : vector<8x256xf32>, i32 -> vector<8x256xf32>
    %19 = vector.extract_strided_slice %6 {offsets = [1, 0], sizes = [1, 256], strides = [1, 1]} : vector<9x256xf32> to vector<1x256xf32>
    %20 = vector.broadcast %19 : vector<1x256xf32> to vector<8x256xf32>
    %21 = arith.mulf %18, %20 : vector<8x256xf32>
    %c15_i32 = arith.constant 15 : i32
    %22 = tpu.dynamic_rotate %13 by %c15_i32 dim 1 : vector<8x256xf32>, i32 -> vector<8x256xf32>
    %23 = vector.extract_strided_slice %6 {offsets = [2, 0], sizes = [1, 256], strides = [1, 1]} : vector<9x256xf32> to vector<1x256xf32>
    %24 = vector.broadcast %23 : vector<1x256xf32> to vector<8x256xf32>
    %25 = arith.mulf %22, %24 : vector<8x256xf32>
    %c1_i32 = arith.constant 1 : i32
    %26 = tpu.dynamic_rotate %13 by %c1_i32 dim 1 : vector<8x256xf32>, i32 -> vector<8x256xf32>
    %27 = vector.extract_strided_slice %6 {offsets = [3, 0], sizes = [1, 256], strides = [1, 1]} : vector<9x256xf32> to vector<1x256xf32>
    %28 = vector.broadcast %27 : vector<1x256xf32> to vector<8x256xf32>
    %29 = arith.mulf %26, %28 : vector<8x256xf32>
    %c255_i32 = arith.constant 255 : i32
    %30 = tpu.dynamic_rotate %13 by %c255_i32 dim 1 : vector<8x256xf32>, i32 -> vector<8x256xf32>
    %31 = vector.extract_strided_slice %6 {offsets = [5, 0], sizes = [1, 256], strides = [1, 1]} : vector<9x256xf32> to vector<1x256xf32>
    %32 = vector.broadcast %31 : vector<1x256xf32> to vector<8x256xf32>
    %33 = arith.mulf %30, %32 : vector<8x256xf32>
    %c241_i32 = arith.constant 241 : i32
    %34 = tpu.dynamic_rotate %13 by %c241_i32 dim 1 : vector<8x256xf32>, i32 -> vector<8x256xf32>
    %35 = vector.extract_strided_slice %6 {offsets = [6, 0], sizes = [1, 256], strides = [1, 1]} : vector<9x256xf32> to vector<1x256xf32>
    %36 = vector.broadcast %35 : vector<1x256xf32> to vector<8x256xf32>
    %37 = arith.mulf %34, %36 : vector<8x256xf32>
    %c240_i32 = arith.constant 240 : i32
    %38 = tpu.dynamic_rotate %13 by %c240_i32 dim 1 : vector<8x256xf32>, i32 -> vector<8x256xf32>
    %39 = vector.extract_strided_slice %6 {offsets = [7, 0], sizes = [1, 256], strides = [1, 1]} : vector<9x256xf32> to vector<1x256xf32>
    %40 = vector.broadcast %39 : vector<1x256xf32> to vector<8x256xf32>
    %41 = arith.mulf %38, %40 : vector<8x256xf32>
    %c239_i32 = arith.constant 239 : i32
    %42 = tpu.dynamic_rotate %13 by %c239_i32 dim 1 : vector<8x256xf32>, i32 -> vector<8x256xf32>
    %43 = vector.extract_strided_slice %6 {offsets = [8, 0], sizes = [1, 256], strides = [1, 1]} : vector<9x256xf32> to vector<1x256xf32>
    %44 = vector.broadcast %43 : vector<1x256xf32> to vector<8x256xf32>
    %45 = arith.mulf %42, %44 : vector<8x256xf32>
    %46 = tpu.concatenate %17, %21, %25, %29, %13, %33, %37, %41, %45 in 0 : vector<8x256xf32>, vector<8x256xf32>, vector<8x256xf32>, vector<8x256xf32>, vector<8x256xf32>, vector<8x256xf32>, vector<8x256xf32>, vector<8x256xf32>, vector<8x256xf32> -> vector<72x256xf32>
    %cst_17 = arith.constant dense<0.000000e+00> : vector<8x256xf32>
    %47 = tpu.matmul %1, %46, %cst_17 {dimension_numbers = #tpu.dot_dimension_numbers<[1], [0], [0], [1], [0, 0, 1, 1], [], []>} : vector<8x72xf32>, vector<72x256xf32>, vector<8x256xf32> -> vector<8x256xf32>
    %48 = vector.broadcast %4 : vector<8x1xf32> to vector<8x256xf32>
    %49 = arith.addf %47, %48 : vector<8x256xf32>
    %cst_18 = arith.constant 0.000000e+00 : f32
    %50 = vector.broadcast %cst_18 : f32 to vector<8x256xf32>
    %51 = arith.maximumf %49, %50 : vector<8x256xf32>
    %cst_19 = arith.constant dense<0.000000e+00> : vector<16x256xf32>
    %52 = tpu.matmul %2, %51, %cst_19 {dimension_numbers = #tpu.dot_dimension_numbers<[1], [0], [0], [1], [0, 0, 1, 1], [], []>} : vector<16x8xf32>, vector<8x256xf32>, vector<16x256xf32> -> vector<16x256xf32>
    %53 = vector.broadcast %5 : vector<16x1xf32> to vector<16x256xf32>
    %54 = arith.addf %52, %53 : vector<16x256xf32>
    %55 = arith.addf %54, %8 : vector<16x256xf32>
    %cst_20 = arith.constant 0.000000e+00 : f32
    %56 = vector.broadcast %cst_20 : f32 to vector<16x256xf32>
    %57 = arith.maximumf %55, %56 : vector<16x256xf32>
    %c0_21 = arith.constant 0 : index
    %c0_22 = arith.constant 0 : index
    %c0_23 = arith.constant 0 : index
    %58 = vector.load %arg9[%c0_21, %c0_22, %c0_23] : memref<1x16x256xf32, #tpu.memory_space<vmem>>, vector<1x16x256xf32>
    %59 = vector.shape_cast %58 : vector<1x16x256xf32> to vector<16x256xf32>
    %60 = vector.shape_cast %57 : vector<16x256xf32> to vector<1x16x256xf32>
    tpu.vector_store %arg9[%c0_21, %c0_22, %c0_23], %60 {strides = array<i32>} : memref<1x16x256xf32, #tpu.memory_space<vmem>>, vector<1x16x256xf32>,
    return
  }
  func.func @transform_0(%arg0: i32) -> (i32, i32, i32) {
    %c0_i32 = arith.constant 0 : i32
    %c0_i32_0 = arith.constant 0 : i32
    %c0_i32_1 = arith.constant 0 : i32
    return %arg0, %c0_i32, %c0_i32_0 : i32, i32, i32
  }
  func.func @transform_1(%arg0: i32) -> (i32, i32) {
    %c0_i32 = arith.constant 0 : i32
    %c0_i32_0 = arith.constant 0 : i32
    %c0_i32_1 = arith.constant 0 : i32
    return %c0_i32, %c0_i32_0 : i32, i32
  }
  func.func @transform_2(%arg0: i32) -> (i32, i32) {
    %c0_i32 = arith.constant 0 : i32
    %c0_i32_0 = arith.constant 0 : i32
    %c0_i32_1 = arith.constant 0 : i32
    return %c0_i32, %c0_i32_0 : i32, i32
  }
  func.func @transform_3(%arg0: i32) -> (i32, i32) {
    %c0_i32 = arith.constant 0 : i32
    %c0_i32_0 = arith.constant 0 : i32
    %c0_i32_1 = arith.constant 0 : i32
    return %c0_i32, %c0_i32_0 : i32, i32
  }
  func.func @transform_4(%arg0: i32) -> (i32, i32) {
    %c0_i32 = arith.constant 0 : i32
    %c0_i32_0 = arith.constant 0 : i32
    %c0_i32_1 = arith.constant 0 : i32
    return %c0_i32, %c0_i32_0 : i32, i32
  }
  func.func @transform_5(%arg0: i32) -> (i32, i32) {
    %c0_i32 = arith.constant 0 : i32
    %c0_i32_0 = arith.constant 0 : i32
    %c0_i32_1 = arith.constant 0 : i32
    return %c0_i32, %c0_i32_0 : i32, i32
  }
  func.func @transform_6(%arg0: i32) -> (i32, i32) {
    %c0_i32 = arith.constant 0 : i32
    %c0_i32_0 = arith.constant 0 : i32
    %c0_i32_1 = arith.constant 0 : i32
    return %c0_i32, %c0_i32_0 : i32, i32
  }
  func.func @transform_7(%arg0: i32) -> (i32, i32) {
    %c0_i32 = arith.constant 0 : i32
    %c0_i32_0 = arith.constant 0 : i32
    %c0_i32_1 = arith.constant 0 : i32
    return %c0_i32, %c0_i32_0 : i32, i32
  }
  func.func @transform_8(%arg0: i32) -> (i32, i32, i32) {
    %c0_i32 = arith.constant 0 : i32
    %c0_i32_0 = arith.constant 0 : i32
    %c0_i32_1 = arith.constant 0 : i32
    return %arg0, %c0_i32, %c0_i32_0 : i32, i32, i32
  }
}

</mosaic_0001>

<llo_original>
// kernel: tpu_custom_call.1
$region0: #{tpu_custom_call.1}
  #allocation0 [shape = 'u32[]', space=smem, size = 0x4, offset = 0x4, fixed_abs, tag = 'smem constant byte address 0x4 - core index']
  #allocation1 [shape = 'u32[72,128]{1,0:T(1,128)}', space=vmem, size = 0x9000, scoped, tag = 'internal scratch']
  %s0 = inlined_call_operand.hbm [shape: f32[2,16,256], index: 0, kind: input, shape index: {}]
  %s1 = inlined_call_operand.vmem [shape: f32[9,256], index: 1, kind: input, shape index: {}]
  %s2 = inlined_call_operand.vmem [shape: f32[8,16], index: 2, kind: input, shape index: {}]
  %s3 = inlined_call_operand.vmem [shape: f32[8,1], index: 3, kind: input, shape index: {}]
  %s4 = inlined_call_operand.vmem [shape: f32[8,72], index: 4, kind: input, shape index: {}]
  %s5 = inlined_call_operand.vmem [shape: f32[8,1], index: 5, kind: input, shape index: {}]
  %s6 = inlined_call_operand.vmem [shape: f32[16,8], index: 6, kind: input, shape index: {}]
  %s7 = inlined_call_operand.vmem [shape: f32[16,1], index: 7, kind: input, shape index: {}]
  %s8 = inlined_call_operand.hbm [shape: f32[2,16,256], index: 8, kind: output, shape index: {}]
  %s9 = sld [smem:[#allocation0]]
  $region69: #{tpu_custom_call.1} parent=0
    _
  %s11 = ssub.s32 1, %s9
  %s12 = scalar_select 0, %s11, %s9
  $region1: #{tpu_custom_call.1} parent=0
    #allocation2 [shape = 'u8[32768]{0}', space=vmem, size = 0x8000, scoped, tag = 'input window, operand 0']
    #allocation3 [shape = 's32[2]{0}', space=sflag, size = 0x8, scoped, tag = 'scoped memory for tpu_custom_call.1']
    #allocation4 [shape = 's32[2]{0}', space=sflag, size = 0x8, scoped, tag = 'scoped memory for tpu_custom_call.1']
    #allocation5 [shape = 'u8[32768]{0}', space=vmem, size = 0x8000, scoped, tag = 'output window, operand 0']
    %13 = vsyncpa [#allocation3], 0
    %s14 = scalar_lea.sflag [#allocation3], 1
    %15 = vsyncpa %s14, 0
    %16 = vsyncpa [#allocation4], 0
    %s17 = scalar_lea.sflag [#allocation4], 1
    %18 = vsyncpa %s17, 0
    loop: start=0, step=1, limit=4
    $region2: #{tpu_custom_call.1} parent=1 // loop_pre_header
      _
    $region3: #{tpu_custom_call.1} parent=1 // loop_header
      %s20 = sphi 0, %s24
      %p21 = scmp.ge.s32.totalorder %s20, 4
      %s30 = sphi 0, %s32
      %s33 = sphi 0, %s30
      %s34 = sphi 0, %s33
      %s50 = sphi 0, %s34
      %s54 = sphi 0, %s54
      %s56 = sphi 0, %s54
      %s57 = sphi 0, %s56
      %s71 = sphi 0, %s57
      %s75 = sphi 0, %s75
      %s77 = sphi 0, %s75
      %s78 = sphi 0, %s77
      %s92 = sphi 0, %s78
      %s96 = sphi 0, %s96
      %s98 = sphi 0, %s96
      %s99 = sphi 0, %s98
      %s113 = sphi 0, %s99
      %s117 = sphi 0, %s117
      %s119 = sphi 0, %s117
      %s120 = sphi 0, %s119
      %s134 = sphi 0, %s120
      %s138 = sphi 0, %s138
      %s140 = sphi 0, %s138
      %s141 = sphi 0, %s140
      %s155 = sphi 0, %s141
      %s159 = sphi 0, %s159
      %s161 = sphi 0, %s159
      %s162 = sphi 0, %s161
      %s176 = sphi 0, %s162
      %s180 = sphi 0, %s180
      %s182 = sphi 0, %s180
      %s183 = sphi 0, %s182
      %s197 = sphi 0, %s183
      %s203 = sphi 0, %s205
      %s206 = sphi 0, %s203
      %s207 = sphi 0, %s206
      %s223 = sphi 0, %s207
    $region4: #{tpu_custom_call.1} parent=1 // loop_header_branch
      %23 = sbr.rel (%p21) target = $region8
    $region5: #{tpu_custom_call.1} parent=1 // loop_body
      %s25 = ssub.s32 %s20, 1
      %s26 = ssub.s32 %s20, 2
      %s27 = sadd.s32 %s20, 1
      %s28 = ssub.s32 %s20, %s27
      %p29 = scmp.eq.s32.totalorder %s28, 0
      %s31 = sadd.s32 %s30, 1
      %s32 = scalar_select %p29, %s30, %s31
      %p35 = pneg %p29
      %p36 = scmp.eq.s32.totalorder %s20, 1
      %p37 = por %p35, %p36
      %p38 = scmp.ne.s32.totalorder %s30, %s33
      %p39 = scmp.eq.s32.totalorder %s20, 0
      %p40 = por %p38, %p39
      %p41 = scmp.ne.s32.totalorder %s30, %s33
      %p42 = scmp.eq.s32.totalorder %s25, 1
      %p43 = por %p41, %p42
      %p44 = scmp.ne.s32.totalorder %s33, %s34
      %p45 = scmp.eq.s32.totalorder %s25, 0
      %p46 = por %p44, %p45
      %p47 = scmp.ne.s32.totalorder %s33, %s34
      %p48 = scmp.eq.s32.totalorder %s26, 1
      %p49 = por %p47, %p48
      %p51 = scmp.ne.s32.totalorder %s34, %s50
      %p52 = scmp.eq.s32.totalorder %s26, 0
      %p53 = por %p51, %p52
      %s55 = sadd.s32 %s54, 1
      %p58 = scmp.eq.s32.totalorder %s20, 1
      %p59 = scmp.ne.s32.totalorder %s54, %s56
      %p60 = scmp.eq.s32.totalorder %s20, 0
      %p61 = por %p59, %p60
      %p62 = scmp.ne.s32.totalorder %s54, %s56
      %p63 = scmp.eq.s32.totalorder %s25, 1
      %p64 = por %p62, %p63
      %p65 = scmp.ne.s32.totalorder %s56, %s57
      %p66 = scmp.eq.s32.totalorder %s25, 0
      %p67 = por %p65, %p66
      %p68 = scmp.ne.s32.totalorder %s56, %s57
      %p69 = scmp.eq.s32.totalorder %s26, 1
      %p70 = por %p68, %p69
      %p72 = scmp.ne.s32.totalorder %s57, %s71
      %p73 = scmp.eq.s32.totalorder %s26, 0
      %p74 = por %p72, %p73
      %s76 = sadd.s32 %s75, 1
      %p79 = scmp.eq.s32.totalorder %s20, 1
      %p80 = scmp.ne.s32.totalorder %s75, %s77
      %p81 = scmp.eq.s32.totalorder %s20, 0
      %p82 = por %p80, %p81
      %p83 = scmp.ne.s32.totalorder %s75, %s77
      %p84 = scmp.eq.s32.totalorder %s25, 1
      %p85 = por %p83, %p84
      %p86 = scmp.ne.s32.totalorder %s77, %s78
      %p87 = scmp.eq.s32.totalorder %s25, 0
      %p88 = por %p86, %p87
      %p89 = scmp.ne.s32.totalorder %s77, %s78
      %p90 = scmp.eq.s32.totalorder %s26, 1
      %p91 = por %p89, %p90
      %p93 = scmp.ne.s32.totalorder %s78, %s92
      %p94 = scmp.eq.s32.totalorder %s26, 0
      %p95 = por %p93, %p94
      %s97 = sadd.s32 %s96, 1
      %p100 = scmp.eq.s32.totalorder %s20, 1
      %p101 = scmp.ne.s32.totalorder %s96, %s98
      %p102 = scmp.eq.s32.totalorder %s20, 0
      %p103 = por %p101, %p102
      %p104 = scmp.ne.s32.totalorder %s96, %s98
      %p105 = scmp.eq.s32.totalorder %s25, 1
      %p106 = por %p104, %p105
      %p107 = scmp.ne.s32.totalorder %s98, %s99
      %p108 = scmp.eq.s32.totalorder %s25, 0
      %p109 = por %p107, %p108
      %p110 = scmp.ne.s32.totalorder %s98, %s99
      %p111 = scmp.eq.s32.totalorder %s26, 1
      %p112 = por %p110, %p111
      %p114 = scmp.ne.s32.totalorder %s99, %s113
      %p115 = scmp.eq.s32.totalorder %s26, 0
      %p116 = por %p114, %p115
      %s118 = sadd.s32 %s117, 1
      %p121 = scmp.eq.s32.totalorder %s20, 1
      %p122 = scmp.ne.s32.totalorder %s117, %s119
      %p123 = scmp.eq.s32.totalorder %s20, 0
      %p124 = por %p122, %p123
      %p125 = scmp.ne.s32.totalorder %s117, %s119
      %p126 = scmp.eq.s32.totalorder %s25, 1
      %p127 = por %p125, %p126
      %p128 = scmp.ne.s32.totalorder %s119, %s120
      %p129 = scmp.eq.s32.totalorder %s25, 0
      %p130 = por %p128, %p129
      %p131 = scmp.ne.s32.totalorder %s119, %s120
      %p132 = scmp.eq.s32.totalorder %s26, 1
      %p133 = por %p131, %p132
      %p135 = scmp.ne.s32.totalorder %s120, %s134
      %p136 = scmp.eq.s32.totalorder %s26, 0
      %p137 = por %p135, %p136
      %s139 = sadd.s32 %s138, 1
      %p142 = scmp.eq.s32.totalorder %s20, 1
      %p143 = scmp.ne.s32.totalorder %s138, %s140
      %p144 = scmp.eq.s32.totalorder %s20, 0
      %p145 = por %p143, %p144
      %p146 = scmp.ne.s32.totalorder %s138, %s140
      %p147 = scmp.eq.s32.totalorder %s25, 1
      %p148 = por %p146, %p147
      %p149 = scmp.ne.s32.totalorder %s140, %s141
      %p150 = scmp.eq.s32.totalorder %s25, 0
      %p151 = por %p149, %p150
      %p152 = scmp.ne.s32.totalorder %s140, %s141
      %p153 = scmp.eq.s32.totalorder %s26, 1
      %p154 = por %p152, %p153
      %p156 = scmp.ne.s32.totalorder %s141, %s155
      %p157 = scmp.eq.s32.totalorder %s26, 0
      %p158 = por %p156, %p157
      %s160 = sadd.s32 %s159, 1
      %p163 = scmp.eq.s32.totalorder %s20, 1
      %p164 = scmp.ne.s32.totalorder %s159, %s161
      %p165 = scmp.eq.s32.totalorder %s20, 0
      %p166 = por %p164, %p165
      %p167 = scmp.ne.s32.totalorder %s159, %s161
      %p168 = scmp.eq.s32.totalorder %s25, 1
      %p169 = por %p167, %p168
      %p170 = scmp.ne.s32.totalorder %s161, %s162
      %p171 = scmp.eq.s32.totalorder %s25, 0
      %p172 = por %p170, %p171
      %p173 = scmp.ne.s32.totalorder %s161, %s162
      %p174 = scmp.eq.s32.totalorder %s26, 1
      %p175 = por %p173, %p174
      %p177 = scmp.ne.s32.totalorder %s162, %s176
      %p178 = scmp.eq.s32.totalorder %s26, 0
      %p179 = por %p177, %p178
      %s181 = sadd.s32 %s180, 1
      %p184 = scmp.eq.s32.totalorder %s20, 1
      %p185 = scmp.ne.s32.totalorder %s180, %s182
      %p186 = scmp.eq.s32.totalorder %s20, 0
      %p187 = por %p185, %p186
      %p188 = scmp.ne.s32.totalorder %s180, %s182
      %p189 = scmp.eq.s32.totalorder %s25, 1
      %p190 = por %p188, %p189
      %p191 = scmp.ne.s32.totalorder %s182, %s183
      %p192 = scmp.eq.s32.totalorder %s25, 0
      %p193 = por %p191, %p192
      %p194 = scmp.ne.s32.totalorder %s182, %s183
      %p195 = scmp.eq.s32.totalorder %s26, 1
      %p196 = por %p194, %p195
      %p198 = scmp.ne.s32.totalorder %s183, %s197
      %p199 = scmp.eq.s32.totalorder %s26, 0
      %p200 = por %p198, %p199
      %s201 = ssub.s32 %s20, %s27
      %p202 = scmp.eq.s32.totalorder %s201, 0
      %s204 = sadd.s32 %s203, 1
      %s205 = scalar_select %p202, %s203, %s204
      %p208 = pneg %p202
      %p209 = scmp.eq.s32.totalorder %s20, 1
      %p210 = por %p208, %p209
      %p211 = scmp.ne.s32.totalorder %s203, %s206
      %p212 = scmp.eq.s32.totalorder %s20, 0
      %p213 = por %p211, %p212
      %p214 = scmp.ne.s32.totalorder %s203, %s206
      %p215 = scmp.eq.s32.totalorder %s25, 1
      %p216 = por %p214, %p215
      %p217 = scmp.ne.s32.totalorder %s206, %s207
      %p218 = scmp.eq.s32.totalorder %s25, 0
      %p219 = por %p217, %p218
      %p220 = scmp.ne.s32.totalorder %s206, %s207
      %p221 = scmp.eq.s32.totalorder %s26, 1
      %p222 = por %p220, %p221
      %p224 = scmp.ne.s32.totalorder %s207, %s223
      %p225 = scmp.eq.s32.totalorder %s26, 0
      %p226 = por %p224, %p225
      %p227 = scmp.le.s32.totalorder 1, %s20
      %p228 = scmp.lt.s32.totalorder %s20, 3
      %p229 = pnand %p227, %p228
      %p230 = pneg %p229
      // Predicated region
      $region9: #{tpu_custom_call.1} parent=5 // pred_check
        _
      $region10: #{tpu_custom_call.1} parent=5 // pred_check_branch
        %232 = sbr.rel (%p229) target = $region12
      $region11: #{tpu_custom_call.1} parent=5 // pred_region
        %s233 = ssub.s32 %s20, 1
        // Predicated region
        $region13: #{tpu_custom_call.1} parent=11 // pred_check
          %p234 = pneg %p67
        $region14: #{tpu_custom_call.1} parent=11 // pred_check_branch
          %236 = sbr.rel (%p234) target = $region16
        $region15: #{tpu_custom_call.1} parent=11 // pred_region
          _
        $region16: #{tpu_custom_call.1} parent=11 // pred_fallthru
          _
        // Predicated region
        $region17: #{tpu_custom_call.1} parent=11 // pred_check
          %p237 = pneg %p88
        $region18: #{tpu_custom_call.1} parent=11 // pred_check_branch
          %239 = sbr.rel (%p237) target = $region20
        $region19: #{tpu_custom_call.1} parent=11 // pred_region
          _
        $region20: #{tpu_custom_call.1} parent=11 // pred_fallthru
          _
        // Predicated region
        $region21: #{tpu_custom_call.1} parent=11 // pred_check
          %p240 = pneg %p109
        $region22: #{tpu_custom_call.1} parent=11 // pred_check_branch
          %242 = sbr.rel (%p240) target = $region24
        $region23: #{tpu_custom_call.1} parent=11 // pred_region
          _
        $region24: #{tpu_custom_call.1} parent=11 // pred_fallthru
          _
        // Predicated region
        $region25: #{tpu_custom_call.1} parent=11 // pred_check
          %p243 = pneg %p130
        $region26: #{tpu_custom_call.1} parent=11 // pred_check_branch
          %245 = sbr.rel (%p243) target = $region28
        $region27: #{tpu_custom_call.1} parent=11 // pred_region
          _
        $region28: #{tpu_custom_call.1} parent=11 // pred_fallthru
          _
        // Predicated region
        $region29: #{tpu_custom_call.1} parent=11 // pred_check
          %p246 = pneg %p151
        $region30: #{tpu_custom_call.1} parent=11 // pred_check_branch
          %248 = sbr.rel (%p246) target = $region32
        $region31: #{tpu_custom_call.1} parent=11 // pred_region
          _
        $region32: #{tpu_custom_call.1} parent=11 // pred_fallthru
          _
        // Predicated region
        $region33: #{tpu_custom_call.1} parent=11 // pred_check
          %p249 = pneg %p172
        $region34: #{tpu_custom_call.1} parent=11 // pred_check_branch
          %251 = sbr.rel (%p249) target = $region36
        $region35: #{tpu_custom_call.1} parent=11 // pred_region
          _
        $region36: #{tpu_custom_call.1} parent=11 // pred_fallthru
          _
        // Predicated region
        $region37: #{tpu_custom_call.1} parent=11 // pred_check
          %p252 = pneg %p193
        $region38: #{tpu_custom_call.1} parent=11 // pred_check_branch
          %254 = sbr.rel (%p252) target = $region40
        $region39: #{tpu_custom_call.1} parent=11 // pred_region
          _
        $region40: #{tpu_custom_call.1} parent=11 // pred_fallthru
          _
      $region12: #{tpu_custom_call.1} parent=5 // pred_fallthru
        _
      %p255 = scmp.lt.s32.totalorder %s20, 2
      // Predicated region
      $region41: #{tpu_custom_call.1} parent=5 // pred_check
        %p256 = pneg %p255
      $region42: #{tpu_custom_call.1} parent=5 // pred_check_branch
        %258 = sbr.rel (%p256) target = $region44
      $region43: #{tpu_custom_call.1} parent=5 // pred_region
        // Predicated region
        $region45: #{tpu_custom_call.1} parent=43 // pred_check
          %p259 = pneg %p40
        $region46: #{tpu_custom_call.1} parent=43 // pred_check_branch
          %261 = sbr.rel (%p259) target = $region48
        $region47: #{tpu_custom_call.1} parent=43 // pred_region
          %s262 = sand.u32 %s30, 1
          %s263 = scalar_lea.sflag [#allocation3], %s262
          %s264 = sand.u32 %s30, 1
          %s265 = smul.addr %s264, 32
          %s266 = scalar_lea.vmem [#allocation2], %s265
          %268 = vsyncadd %s263, 0
          %s269 = smul.addr %s20, 4
          %s270 = smul.addr %s269, 8
          %s271 = scalar_lea.hbm %s0, %s270
          %s272 = sshll.u32 %s271, 4
          %s273 = int_to_ptr.hbm [resolvable:$true] %s272
          %s274 = sshll.u32 %s266, 4
          %s275 = int_to_ptr.vmem [resolvable:$true] %s274
          %280 = dma.hbm_to_vmem [thread:$0]  %s273, 512, %s275, %s263, 256, 256, 16
        $region48: #{tpu_custom_call.1} parent=43 // pred_fallthru
          _
      $region44: #{tpu_custom_call.1} parent=5 // pred_fallthru
        _
      %p281 = scmp.le.s32.totalorder 1, %s20
      %p282 = scmp.lt.s32.totalorder %s20, 3
      %p283 = pnand %p281, %p282
      %p284 = pneg %p283
      // Predicated region
      $region49: #{tpu_custom_call.1} parent=5 // pred_check
        _
      $region50: #{tpu_custom_call.1} parent=5 // pred_check_branch
        %286 = sbr.rel (%p283) target = $region52
      $region51: #{tpu_custom_call.1} parent=5 // pred_region
        %s287 = ssub.s32 %s20, 1
        %s288 = sand.u32 %s33, 1
        %s289 = scalar_lea.sflag [#allocation3], %s288
        %s290 = sand.u32 %s33, 1
        %s291 = smul.addr %s290, 32
        %s292 = scalar_lea.vmem [#allocation2], %s291
        // Predicated region
        $region53: #{tpu_custom_call.1} parent=51 // pred_check
          %p293 = pneg %p46
        $region54: #{tpu_custom_call.1} parent=51 // pred_check_branch
          %295 = sbr.rel (%p293) target = $region56
        $region55: #{tpu_custom_call.1} parent=51 // pred_region
          %297 = dma.done %s289, 512
        $region56: #{tpu_custom_call.1} parent=51 // pred_fallthru
          _
        %s298 = sand.u32 %s33, 1
        %s299 = scalar_lea.sflag [#allocation3], %s298
        %s300 = sand.u32 %s33, 1
        %s301 = smul.addr %s300, 32
        %s302 = scalar_lea.vmem [#allocation2], %s301
        %p303 = pneg %p46
        %p304 = pneg %p43
        %p305 = pneg %p67
        %p306 = pneg %p64
        %p307 = pneg %p88
        %p308 = pneg %p85
        %p309 = pneg %p109
        %p310 = pneg %p106
        %p311 = pneg %p130
        %p312 = pneg %p127
        %p313 = pneg %p151
        %p314 = pneg %p148
        %p315 = pneg %p172
        %p316 = pneg %p169
        %p317 = pneg %p193
        %p318 = pneg %p190
        %p319 = pneg %p219
        %p320 = pneg %p216
        %s321 = sand.u32 %s206, 1
        %s322 = scalar_lea.sflag [#allocation4], %s321
        %s323 = sand.u32 %s206, 1
        %s324 = smul.addr %s323, 32
        %s325 = scalar_lea.vmem [#allocation5], %s324
        %v326 = vld [vmem:[%s2] sm:$0xff]
        %v327 = vld [vmem:[%s4] sm:$0xff]
        %v328 = vld [vmem:[%s6] sm:$0xff]
        %v329 = vld [vmem:[%s6 + $0x8] sm:$0xff]
        %v330 = vld [vmem:[%s3] sm:$0xff]
        %v331 = vld [vmem:[%s5] sm:$0xff]
        %v332 = vld [vmem:[%s7] sm:$0xff]
        %v333 = vld [vmem:[%s7 + $0x8] sm:$0xff]
        %v334 = vld [vmem:[%s1] sm:$0xff]
        %v335 = vld [vmem:[%s1 + $0x8] sm:$0xff]
        %v336 = vld [vmem:[%s1 + $0x10] sm:$0x1]
        %v337 = vld [vmem:[%s1 + $0x18] sm:$0x1]
        %v338 = vld [vmem:[%s292] sm:$0xff]
        %v339 = vld [vmem:[%s292 + $0x8] sm:$0xff]
        %v340 = vld [vmem:[%s292 + $0x10] sm:$0xff]
        %v341 = vld [vmem:[%s292 + $0x18] sm:$0xff]
        %343 = vset.pattern.permute.xlu0 0
        %344 = vperm.xlu0 %343, %v330
        %v345 = vpop.permute.xlu0 %344
        %vm347 = vcmask 130048
        %v349 = vsel %vm347, %v326, 0
        %351 = vmatpush.msra.mxu0 0.0
        %352 = vmatpush.msra.mxu0 0.0
        %353 = vmatpush.msra.mxu0 0.0
        %354 = vmatpush.msra.mxu0 0.0
        %355 = vmatpush.msra.mxu0 0.0
        %356 = vmatpush.msra.mxu0 0.0
        %357 = vmatpush.msra.mxu0 0.0
        %358 = vmatpush.msra.mxu0 0.0
        %359 = vmatpush.msra.mxu0 0.0
        %360 = vmatpush.msra.mxu0 0.0
        %361 = vmatpush.msra.mxu0 0.0
        %362 = vmatpush.msra.mxu0 0.0
        %363 = vmatpush.msra.mxu0 0.0
        %364 = vmatpush.msra.mxu0 0.0
        %365 = vmatpush.msra.mxu0 %v340
        %366 = vmatpush.msra.mxu0 %v338
        %367 = vmatmul.f32.gmra.mxu0 %v349
        %v368 = vpop.f32.mrf.mxu0
        %v369 = vadd.f32 %v345, %v368
        %370 = vdwg.mxu0
        %371 = vmatpush.msra.mxu0 0.0
        %372 = vmatpush.msra.mxu0 0.0
        %373 = vmatpush.msra.mxu0 0.0
        %374 = vmatpush.msra.mxu0 0.0
        %375 = vmatpush.msra.mxu0 0.0
        %376 = vmatpush.msra.mxu0 0.0
        %377 = vmatpush.msra.mxu0 0.0
        %378 = vmatpush.msra.mxu0 0.0
        %379 = vmatpush.msra.mxu0 0.0
        %380 = vmatpush.msra.mxu0 0.0
        %381 = vmatpush.msra.mxu0 0.0
        %382 = vmatpush.msra.mxu0 0.0
        %383 = vmatpush.msra.mxu0 0.0
        %384 = vmatpush.msra.mxu0 0.0
        %385 = vmatpush.msra.mxu0 %v341
        %386 = vmatpush.msra.mxu0 %v339
        %387 = vmatmul.f32.gmra.mxu0 %v349
        %v388 = vpop.f32.mrf.mxu0
        %v389 = vadd.f32 %v345, %v388
        %390 = vdwg.mxu0
        %v391 = vmax.f32 %v369, 0.0
        %v392 = vmax.f32 %v389, 0.0
        %393 = vrot.lane.b32.xlu0 %v391, 17
        %v394 = vpop.permute.xlu0 %393
        %395 = vrot.lane.b32.xlu0 %v392, 17
        %v396 = vpop.permute.xlu0 %395
        %v397 = vlaneseq
        %v398 = vand.u32 %v397, 127
        %vm399 = vcmp.lt.s32.totalorder %v398, 17
        %v400 = vsel %vm399, %v394, %v396
        %v401 = vsel %vm399, %v396, %v394
        %v402 = vperm.slane %v334, 0
        %v403 = vperm.slane %v335, 0
        %v404 = vmul.f32 %v401, %v402
        %v405 = vmul.f32 %v400, %v403
        %406 = vrot.lane.b32.xlu0 %v391, 16
        %v407 = vpop.permute.xlu0 %406
        %408 = vrot.lane.b32.xlu0 %v392, 16
        %v409 = vpop.permute.xlu0 %408
        %vm410 = vcmp.lt.s32.totalorder %v398, 16
        %v411 = vsel %vm410, %v407, %v409
        %v412 = vsel %vm410, %v409, %v407
        %v413 = vperm.slane %v334, 1
        %v414 = vperm.slane %v335, 1
        %v415 = vmul.f32 %v412, %v413
        %v416 = vmul.f32 %v411, %v414
        %417 = vrot.lane.b32.xlu0 %v391, 15
        %v418 = vpop.permute.xlu0 %417
        %419 = vrot.lane.b32.xlu0 %v392, 15
        %v420 = vpop.permute.xlu0 %419
        %vm421 = vcmp.lt.s32.totalorder %v398, 15
        %v422 = vsel %vm421, %v418, %v420
        %v423 = vsel %vm421, %v420, %v418
        %v424 = vperm.slane %v334, 2
        %v425 = vperm.slane %v335, 2
        %v426 = vmul.f32 %v423, %v424
        %v427 = vmul.f32 %v422, %v425
        %428 = vrot.lane.b32.xlu0 %v391, 1
        %v429 = vpop.permute.xlu0 %428
        %430 = vrot.lane.b32.xlu0 %v392, 1
        %v431 = vpop.permute.xlu0 %430
        %vm432 = vcmp.lt.s32.totalorder %v398, 1
        %v433 = vsel %vm432, %v429, %v431
        %v434 = vsel %vm432, %v431, %v429
        %v435 = vperm.slane %v334, 3
        %v436 = vperm.slane %v335, 3
        %v437 = vmul.f32 %v434, %v435
        %v438 = vmul.f32 %v433, %v436
        %439 = vrot.lane.b32.xlu0 %v391, 127
        %v440 = vpop.permute.xlu0 %439
        %441 = vrot.lane.b32.xlu0 %v392, 127
        %v442 = vpop.permute.xlu0 %441
        %vm443 = vcmp.lt.s32.totalorder %v398, 127
        %v444 = vsel %vm443, %v440, %v442
        %v445 = vsel %vm443, %v442, %v440
        %v446 = vperm.slane %v334, 5
        %v447 = vperm.slane %v335, 5
        %v448 = vmul.f32 %v444, %v446
        %v449 = vmul.f32 %v445, %v447
        %450 = vrot.lane.b32.xlu0 %v391, 113
        %v451 = vpop.permute.xlu0 %450
        %452 = vrot.lane.b32.xlu0 %v392, 113
        %v453 = vpop.permute.xlu0 %452
        %vm454 = vcmp.lt.s32.totalorder %v398, 113
        %v455 = vsel %vm454, %v451, %v453
        %v456 = vsel %vm454, %v453, %v451
        %v457 = vperm.slane %v334, 6
        %v458 = vperm.slane %v335, 6
        %v459 = vmul.f32 %v455, %v457
        %v460 = vmul.f32 %v456, %v458
        %461 = vrot.lane.b32.xlu0 %v391, 112
        %v462 = vpop.permute.xlu0 %461
        %463 = vrot.lane.b32.xlu0 %v392, 112
        %v464 = vpop.permute.xlu0 %463
        %vm465 = vcmp.lt.s32.totalorder %v398, 112
        %v466 = vsel %vm465, %v462, %v464
        %v467 = vsel %vm465, %v464, %v462
        %v468 = vperm.slane %v334, 7
        %v469 = vperm.slane %v335, 7
        %v470 = vmul.f32 %v466, %v468
        %v471 = vmul.f32 %v467, %v469
        %472 = vrot.lane.b32.xlu0 %v391, 111
        %v473 = vpop.permute.xlu0 %472
        %474 = vrot.lane.b32.xlu0 %v392, 111
        %v475 = vpop.permute.xlu0 %474
        %vm476 = vcmp.lt.s32.totalorder %v398, 111
        %v477 = vsel %vm476, %v473, %v475
        %v478 = vsel %vm476, %v475, %v473
        %v479 = vperm.slane %v336, 0
        %v480 = vperm.slane %v337, 0
        %v481 = vmul.f32 %v477, %v479
        %v482 = vmul.f32 %v478, %v480
        %484 = vset.pattern.permute.xlu0 0
        %485 = vperm.xlu0 %484, %v331
        %v486 = vpop.permute.xlu0 %485
        %vm488 = vcmask 588800
        %v490 = vsel %vm488, %v327, 0
        %492 = vmatpush.msra.mxu0 0.0
        %493 = vmatpush.msra.mxu0 0.0
        %494 = vmatpush.msra.mxu0 0.0
        %495 = vmatpush.msra.mxu0 0.0
        %496 = vmatpush.msra.mxu0 0.0
        %497 = vmatpush.msra.mxu0 0.0
        %498 = vmatpush.msra.mxu0 0.0
        %499 = vmatpush.msra.mxu0 %v481
        %500 = vmatpush.msra.mxu0 %v470
        %501 = vmatpush.msra.mxu0 %v459
        %502 = vmatpush.msra.mxu0 %v448
        %503 = vmatpush.msra.mxu0 %v391
        %504 = vmatpush.msra.mxu0 %v437
        %505 = vmatpush.msra.mxu0 %v426
        %506 = vmatpush.msra.mxu0 %v415
        %507 = vmatpush.msra.mxu0 %v404
        %508 = vmatmul.f32.gmra.mxu0 %v490
        %v509 = vpop.f32.mrf.mxu0
        %v510 = vadd.f32 %v486, %v509
        %511 = vdwg.mxu0
        %512 = vmatpush.msra.mxu0 0.0
        %513 = vmatpush.msra.mxu0 0.0
        %514 = vmatpush.msra.mxu0 0.0
        %515 = vmatpush.msra.mxu0 0.0
        %516 = vmatpush.msra.mxu0 0.0
        %517 = vmatpush.msra.mxu0 0.0
        %518 = vmatpush.msra.mxu0 0.0
        %519 = vmatpush.msra.mxu0 %v482
        %520 = vmatpush.msra.mxu0 %v471
        %521 = vmatpush.msra.mxu0 %v460
        %522 = vmatpush.msra.mxu0 %v449
        %523 = vmatpush.msra.mxu0 %v392
        %524 = vmatpush.msra.mxu0 %v438
        %525 = vmatpush.msra.mxu0 %v427
        %526 = vmatpush.msra.mxu0 %v416
        %527 = vmatpush.msra.mxu0 %v405
        %528 = vmatmul.f32.gmra.mxu0 %v490
        %v529 = vpop.f32.mrf.mxu0
        %v530 = vadd.f32 %v486, %v529
        %531 = vdwg.mxu0
        %v532 = vmax.f32 %v510, 0.0
        %v533 = vmax.f32 %v530, 0.0
        %535 = vset.pattern.permute.xlu0 0
        %536 = vperm.xlu0 %535, %v332
        %v537 = vpop.permute.xlu0 %536
        %540 = vset.pattern.permute.xlu0 0
        %541 = vperm.xlu0 %540, %v333
        %v542 = vpop.permute.xlu0 %541
        %vm544 = vcmask 64512
        %v546 = vsel %vm544, %v328, 0
        %v549 = vsel %vm544, %v329, 0
        %551 = vmatpush.msra.mxu0 0.0
        %552 = vmatpush.msra.mxu0 0.0
        %553 = vmatpush.msra.mxu0 0.0
        %554 = vmatpush.msra.mxu0 0.0
        %555 = vmatpush.msra.mxu0 0.0
        %556 = vmatpush.msra.mxu0 0.0
        %557 = vmatpush.msra.mxu0 0.0
        %558 = vmatpush.msra.mxu0 0.0
        %559 = vmatpush.msra.mxu0 0.0
        %560 = vmatpush.msra.mxu0 0.0
        %561 = vmatpush.msra.mxu0 0.0
        %562 = vmatpush.msra.mxu0 0.0
        %563 = vmatpush.msra.mxu0 0.0
        %564 = vmatpush.msra.mxu0 0.0
        %565 = vmatpush.msra.mxu0 0.0
        %566 = vmatpush.msra.mxu0 %v532
        %567 = vmatmul.f32.gmra.mxu0 %v546
        %v568 = vpop.f32.mrf.mxu0
        %v569 = vadd.f32 %v537, %v568
        %570 = vmatmul.f32.gmra.mxu0 %v549
        %v571 = vpop.f32.mrf.mxu0
        %v572 = vadd.f32 %v542, %v571
        %573 = vdwg.mxu0
        %574 = vmatpush.msra.mxu0 0.0
        %575 = vmatpush.msra.mxu0 0.0
        %576 = vmatpush.msra.mxu0 0.0
        %577 = vmatpush.msra.mxu0 0.0
        %578 = vmatpush.msra.mxu0 0.0
        %579 = vmatpush.msra.mxu0 0.0
        %580 = vmatpush.msra.mxu0 0.0
        %581 = vmatpush.msra.mxu0 0.0
        %582 = vmatpush.msra.mxu0 0.0
        %583 = vmatpush.msra.mxu0 0.0
        %584 = vmatpush.msra.mxu0 0.0
        %585 = vmatpush.msra.mxu0 0.0
        %586 = vmatpush.msra.mxu0 0.0
        %587 = vmatpush.msra.mxu0 0.0
        %588 = vmatpush.msra.mxu0 0.0
        %589 = vmatpush.msra.mxu0 %v533
        %590 = vmatmul.f32.gmra.mxu0 %v546
        %v591 = vpop.f32.mrf.mxu0
        %v592 = vadd.f32 %v537, %v591
        %593 = vmatmul.f32.gmra.mxu0 %v549
        %v594 = vpop.f32.mrf.mxu0
        %v595 = vadd.f32 %v542, %v594
        %596 = vdwg.mxu0
        %v597 = vadd.f32 %v569, %v338
        %v598 = vadd.f32 %v592, %v339
        %v599 = vadd.f32 %v572, %v340
        %v600 = vadd.f32 %v595, %v341
        %v601 = vmax.f32 %v597, 0.0
        %v602 = vmax.f32 %v598, 0.0
        %v603 = vmax.f32 %v599, 0.0
        %v604 = vmax.f32 %v600, 0.0
        %605 = vst [vmem:[%s325] sm:$0xff] %v601
        %606 = vst [vmem:[%s325 + $0x8] sm:$0xff] %v602
        %607 = vst [vmem:[%s325 + $0x10] sm:$0xff] %v603
        %608 = vst [vmem:[%s325 + $0x18] sm:$0xff] %v604
        %s609 = sand.u32 %s206, 1
        %s610 = scalar_lea.sflag [#allocation4], %s609
        %s611 = sand.u32 %s206, 1
        %s612 = smul.addr %s611, 32
        %s613 = scalar_lea.vmem [#allocation5], %s612
        // Predicated region
        $region57: #{tpu_custom_call.1} parent=51 // pred_check
          %p614 = pneg %p216
        $region58: #{tpu_custom_call.1} parent=51 // pred_check_branch
          %616 = sbr.rel (%p614) target = $region60
        $region59: #{tpu_custom_call.1} parent=51 // pred_region
          %618 = vsyncadd %s610, 0
          %s619 = smul.addr %s25, 4
          %s620 = smul.addr %s619, 8
          %s621 = scalar_lea.hbm %s8, %s620
          %s622 = sshll.u32 %s613, 4
          %s623 = int_to_ptr.vmem [resolvable:$true] %s622
          %s624 = sshll.u32 %s621, 4
          %s625 = int_to_ptr.hbm [resolvable:$true] %s624
          %630 = dma.vmem_to_hbm [thread:$0]  %s623, 512, %s625, %s610, 256, 256, 16
        $region60: #{tpu_custom_call.1} parent=51 // pred_fallthru
          _
      $region52: #{tpu_custom_call.1} parent=5 // pred_fallthru
        _
      %p631 = scmp.le.s32.totalorder 2, %s20
      // Predicated region
      $region61: #{tpu_custom_call.1} parent=5 // pred_check
        %p632 = pneg %p631
      $region62: #{tpu_custom_call.1} parent=5 // pred_check_branch
        %634 = sbr.rel (%p632) target = $region64
      $region63: #{tpu_custom_call.1} parent=5 // pred_region
        %s635 = ssub.s32 %s20, 2
        // Predicated region
        $region65: #{tpu_custom_call.1} parent=63 // pred_check
          %p636 = pneg %p222
        $region66: #{tpu_custom_call.1} parent=63 // pred_check_branch
          %638 = sbr.rel (%p636) target = $region68
        $region67: #{tpu_custom_call.1} parent=63 // pred_region
          %s639 = sand.u32 %s207, 1
          %s640 = scalar_lea.sflag [#allocation4], %s639
          %s641 = sand.u32 %s207, 1
          %s642 = smul.addr %s641, 32
          %s643 = scalar_lea.vmem [#allocation5], %s642
          %645 = dma.done %s640, 512
        $region68: #{tpu_custom_call.1} parent=63 // pred_fallthru
          _
      $region64: #{tpu_custom_call.1} parent=5 // pred_fallthru
        _
    $region6: #{tpu_custom_call.1} parent=1 // loop_footer
      %s24 = sadd.s32 1, %s20
    $region7: #{tpu_custom_call.1} parent=1 // loop_footer_branch
      %19 = sbr.rel target = $region3
    $region8: #{tpu_custom_call.1} parent=1 // loop_exit
      _
    %646 = vsyncpa [#allocation3], 1
    %s647 = scalar_lea.sflag [#allocation3], 1
    %648 = vsyncpa %s647, 1
    %649 = vsyncpa [#allocation4], 1
    %s650 = scalar_lea.sflag [#allocation4], 1
    %651 = vsyncpa %s650, 1

</llo_original>
